<compile_context>
chip_gen: v7x
topology: tpu7x:2x2x1
jax: 0.10.0
libtpu: 0.0.40
codegen_flags: <defaults>
</compile_context>

<pallas_src>
import functools

import numpy as np
import jax
import jax.numpy as jnp
from jax import lax
from jax.experimental import pallas as pl
from jax.experimental.pallas import tpu as pltpu


# ---------------------------------------------------------------------------
# Trace-time weight restructuring (kw taps + column padding folded into RHS)
# ---------------------------------------------------------------------------
def _conv_as_matmuls(w_hwio, scale, w_in, w_out, stride):
    """3x3 conv (pad=1) -> 3 structured RHS matrices, one per kh.

    Matrix[kh][j*Ci + c, jo*Co + co] = scale[co] * w[kh, kw, c, co]
        with kw = (j + 1) - jo*stride, zero if kw not in [0, 2].
    Out-of-range kw (the zero column padding) simply has no weight row, so the
    kernel needs no column halo, no roll and no im2col.  Built at trace time.
    """
    ci, co = w_hwio.shape[2], w_hwio.shape[3]
    j = np.arange(w_in)[:, None, None]
    jo = np.arange(w_out)[None, :, None]
    kw = np.arange(3)[None, None, :]
    sel = (j + 1 == jo * stride + kw).astype(np.float32)          # (Win, Wout, 3)
    w = w_hwio.astype(jnp.float32) * scale.astype(jnp.float32)[None, None, None, :]
    m = jnp.einsum("jok,hkcd->hjcod", jnp.asarray(sel), w)        # (3,Win,Ci,Wout,Co)
    return m.reshape(3, w_in * ci, w_out * co).astype(jnp.bfloat16)


def _proj_as_matmul(ws, scale, w_in, w_out, stride):
    """1x1 strided projection -> one structured RHS (W_in*Ci, W_out*Co)."""
    ci, co = ws.shape
    j = np.arange(w_in)[:, None]
    jo = np.arange(w_out)[None, :]
    sel = (j == jo * stride).astype(np.float32)                   # (Win, Wout)
    w = ws.astype(jnp.float32) * scale.astype(jnp.float32)[None, :]
    m = jnp.einsum("jo,cd->jcod", jnp.asarray(sel), w)            # (Win,Ci,Wout,Co)
    return m.reshape(w_in * ci, w_out * co).astype(jnp.bfloat16)


def _tile_bias(bias, w_out):
    return jnp.tile(bias.astype(jnp.float32), w_out).reshape(1, -1)


# ---------------------------------------------------------------------------
# Kernel: whole BasicBlock for one batch element, fully resident in VMEM
# ---------------------------------------------------------------------------
def _basic_block_kernel(*refs, H, W, Cin, Cout, Hout, Wout, stride, has_proj):
    if has_proj:
        (x_ref, wk1_ref, b1_ref, wk2_ref, b2_ref, wp_ref, bp_ref,
         o_ref, xpad_ref, y1pad_ref) = refs
    else:
        (x_ref, wk1_ref, b1_ref, wk2_ref, b2_ref,
         o_ref, xpad_ref, y1pad_ref) = refs

    x = x_ref[0]                                     # (H, W*Cin) f32, lane-dense

    # ---- padded bf16 input slab: zero only the two halo rows, write interior
    #      once (cast to bf16 exactly here).  Not gated on program_id: safe
    #      under megacore 'parallel' sharding. -----------------------------
    xpad_ref[0:1, :] = jnp.zeros((1, W * Cin), jnp.bfloat16)
    xpad_ref[H + 1:H + 2, :] = jnp.zeros((1, W * Cin), jnp.bfloat16)
    xpad_ref[1:H + 1, :] = x.astype(jnp.bfloat16)

    def rows(ref, start, count):
        v = ref[start:start + (count - 1) * stride + 1, :]
        return v if stride == 1 else v[::stride]     # stride path untested shapes

    # ---- conv1 (BN1 scale folded into wk1) + bias + ReLU -------------------
    acc1 = jnp.zeros((Hout, Wout * Cout), jnp.float32)
    for kh in range(3):
        acc1 = acc1 + jnp.dot(rows(xpad_ref, kh, Hout), wk1_ref[kh],
                              preferred_element_type=jnp.float32)
    y1 = jnp.maximum(acc1 + b1_ref[...], 0.0)        # (Hout, Wout*Cout) f32

    # ---- padded bf16 y1 slab ------------------------------------------------
    y1pad_ref[0:1, :] = jnp.zeros((1, Wout * Cout), jnp.bfloat16)
    y1pad_ref[Hout + 1:Hout + 2, :] = jnp.zeros((1, Wout * Cout), jnp.bfloat16)
    y1pad_ref[1:Hout + 1, :] = y1.astype(jnp.bfloat16)

    # ---- conv2 (BN2 scale folded into wk2) + bias ---------------------------
    acc2 = jnp.zeros((Hout, Wout * Cout), jnp.float32)
    for kh in range(3):
        acc2 = acc2 + jnp.dot(y1pad_ref[kh:kh + Hout, :], wk2_ref[kh],
                              preferred_element_type=jnp.float32)
    y2 = acc2 + b2_ref[...]

    # ---- shortcut (fused; no extra pallas_call / HBM round trip) ------------
    if has_proj:
        sc = jnp.dot(rows(xpad_ref, 1, Hout), wp_ref[...],
                     preferred_element_type=jnp.float32) + bp_ref[...]
    else:
        sc = x                                       # identity, kept in f32

    # Lane-dense store: trailing dim = Wout*Cout (128 at the test shapes).
    o_ref[0] = jnp.maximum(y2 + sc, 0.0).astype(o_ref.dtype)


# ---------------------------------------------------------------------------
# Wrapper
# ---------------------------------------------------------------------------
def basic_block_forward(x_nhwc, params, *, stride):
    """Fused BasicBlock forward, NHWC input.  `params` holds folded-BN weights."""
    B, H, W, Cin = x_nhwc.shape
    Cout = params["w1"].shape[-1]
    Hout = (H + 2 - 3) // stride + 1                 # true conv output size
    Wout = (W + 2 - 3) // stride + 1
    has_proj = (stride != 1) or (Cin != Cout)

    # Structured matmul weights (BN scale folded in), built at trace time.
    wk1 = _conv_as_matmuls(params["w1"], params["scale1"], W, Wout, stride)
    wk2 = _conv_as_matmuls(params["w2"], params["scale2"], Wout, Wout, 1)
    b1t = _tile_bias(params["bias1"], Wout)
    b2t = _tile_bias(params["bias2"], Wout)

    # Lane-dense 2-D view of x: contiguous NHWC -> (B, H, W*Cin) is free.
    x2d = x_nhwc.astype(jnp.float32).reshape(B, H, W * Cin)

    args = [x2d, wk1, b1t, wk2, b2t]
    in_specs = [
        pl.BlockSpec((1, H, W * Cin), lambda b: (b, 0, 0)),
        pl.BlockSpec((3, W * Cin, Wout * Cout), lambda b: (0, 0, 0)),
        pl.BlockSpec((1, Wout * Cout), lambda b: (0, 0)),
        pl.BlockSpec((3, Wout * Cout, Wout * Cout), lambda b: (0, 0, 0)),
        pl.BlockSpec((1, Wout * Cout), lambda b: (0, 0)),
    ]
    if has_proj:
        wproj = _proj_as_matmul(params["ws"], params["scales"], W, Wout, stride)
        bpt = _tile_bias(params["biass"], Wout)
        args += [wproj, bpt]
        in_specs += [
            pl.BlockSpec((W * Cin, Wout * Cout), lambda b: (0, 0)),
            pl.BlockSpec((1, Wout * Cout), lambda b: (0, 0)),
        ]

    kernel = functools.partial(
        _basic_block_kernel, H=H, W=W, Cin=Cin, Cout=Cout,
        Hout=Hout, Wout=Wout, stride=stride, has_proj=has_proj)

    # Computed VMEM budget (operands double-buffered + bf16 scratch + slack).
    scratch_bytes = ((H + 2) * W * Cin + (Hout + 2) * Wout * Cout) * 2
    operand_bytes = sum(int(a.size) * a.dtype.itemsize for a in args)
    out_block_bytes = Hout * Wout * Cout * 4
    vmem_limit = max(16 * 2 ** 20,
                     4 * (2 * (operand_bytes + out_block_bytes) + scratch_bytes))

    out_flat = pl.pallas_call(
        kernel,
        out_shape=jax.ShapeDtypeStruct((B, Hout, Wout * Cout), jnp.float32),
        grid=(B,),
        in_specs=in_specs,
        out_specs=pl.BlockSpec((1, Hout, Wout * Cout), lambda b: (b, 0, 0)),
        scratch_shapes=[pltpu.VMEM((H + 2, W * Cin), jnp.bfloat16),
                        pltpu.VMEM((Hout + 2, Wout * Cout), jnp.bfloat16)],
        compiler_params=pltpu.CompilerParams(
            dimension_semantics=("parallel",),   # 2 blocks -> both v7x TCs busy
            vmem_limit_bytes=int(vmem_limit)),
    )(*args)
    # Contiguous reshape back to NHWC (metadata-only on the HBM result).
    return out_flat.reshape(B, Hout, Wout, Cout)


# ---------------------------------------------------------------------------
# Pure-JAX reference (same quantization choice: BN scale folded into bf16
# weights, f32 accumulation, f32 bias/ReLU).
# ---------------------------------------------------------------------------
def _ref_conv(x, w_hwio, stride, pad):
    return lax.conv_general_dilated(
        x.astype(jnp.bfloat16), w_hwio.astype(jnp.bfloat16),
        (stride, stride), ((pad, pad), (pad, pad)),
        dimension_numbers=("NHWC", "HWIO", "NHWC"),
        preferred_element_type=jnp.float32)


def basic_block_ref(x, params, *, stride):
    Cin = x.shape[-1]
    Cout = params["w1"].shape[-1]
    y = _ref_conv(x, params["w1"] * params["scale1"], stride, 1) + params["bias1"]
    y = jnp.maximum(y, 0.0)
    y = _ref_conv(y, params["w2"] * params["scale2"], 1, 1) + params["bias2"]
    if stride != 1 or Cin != Cout:
        ws = (params["ws"] * params["scales"]).reshape(1, 1, Cin, Cout)
        sc = _ref_conv(x, ws, stride, 0) + params["biass"]
    else:
        sc = x
    return jnp.maximum(y + sc, 0.0)


def _fold_bn(gamma, beta, mean, var, eps=1e-5):
    scale = gamma / jnp.sqrt(var + eps)
    return scale, beta - mean * scale


def _make_params(key, Cin, Cout, with_proj):
    ks = jax.random.split(key, 16)

    def bn(k0, k1, k2, k3, c):
        gamma = 1.0 + 0.1 * jax.random.normal(k0, (c,), jnp.float32)
        beta = 0.1 * jax.random.normal(k1, (c,), jnp.float32)
        mean = 0.1 * jax.random.normal(k2, (c,), jnp.float32)
        var = jax.random.uniform(k3, (c,), jnp.float32, 0.5, 1.5)
        return _fold_bn(gamma, beta, mean, var)

    s1, b1 = bn(ks[1], ks[2], ks[3], ks[4], Cout)
    s2, b2 = bn(ks[6], ks[7], ks[8], ks[9], Cout)
    p = {"w1": 0.2 * jax.random.normal(ks[0], (3, 3, Cin, Cout), jnp.float32),
         "scale1": s1, "bias1": b1,
         "w2": 0.2 * jax.random.normal(ks[5], (3, 3, Cout, Cout), jnp.float32),
         "scale2": s2, "bias2": b2}
    if with_proj:
        ss, bs = bn(ks[11], ks[12], ks[13], ks[14], Cout)
        p.update({"ws": 0.2 * jax.random.normal(ks[10], (Cin, Cout), jnp.float32),
                  "scales": ss, "biass": bs})
    return p


# ---------------------------------------------------------------------------
if __name__ == "__main__":
    key = jax.random.PRNGKey(0)
    kx1, kp1, kx2, kp2 = jax.random.split(key, 4)

    # Config 1: projection shortcut (Cin != Cout), stride 1.
    # NCHW-equivalent PyTorch input shape is (2, 4, 16, 16); we run NHWC.
    B, H, W, Cin, Cout, stride = 2, 16, 16, 4, 8, 1
    x1 = jax.random.normal(kx1, (B, H, W, Cin), jnp.float32)
    p1 = _make_params(kp1, Cin, Cout, with_proj=True)
    out1 = jax.block_until_ready(basic_block_forward(x1, p1, stride=stride))
    ref1 = basic_block_ref(x1, p1, stride=stride)
    assert out1.shape == ref1.shape == (B, H, W, Cout)
    err1 = float(jnp.max(jnp.abs(out1 - ref1)))
    assert jnp.allclose(out1, ref1, atol=3e-2, rtol=3e-2), f"max abs err = {err1}"

    # Config 2: identity shortcut (Cin == Cout, stride 1).
    C = 8
    x2 = jax.random.normal(kx2, (B, H, W, C), jnp.float32)
    p2 = _make_params(kp2, C, C, with_proj=False)
    out2 = jax.block_until_ready(basic_block_forward(x2, p2, stride=1))
    ref2 = basic_block_ref(x2, p2, stride=1)
    err2 = float(jnp.max(jnp.abs(out2 - ref2)))
    assert jnp.allclose(out2, ref2, atol=3e-2, rtol=3e-2), f"max abs err = {err2}"

    print("KERNEL_OK")
</pallas_src>

<mosaic_0001>
module attributes {stable_mosaic.version = 11 : i64} {
  func.func @_basic_block_kernel(%arg0: i32, %arg1: memref<1x16x64xf32, #tpu.memory_space<vmem>>, %arg2: memref<3x64x128xbf16, #tpu.memory_space<vmem>>, %arg3: memref<1x128xf32, #tpu.memory_space<vmem>>, %arg4: memref<3x128x128xbf16, #tpu.memory_space<vmem>>, %arg5: memref<1x128xf32, #tpu.memory_space<vmem>>, %arg6: memref<64x128xbf16, #tpu.memory_space<vmem>>, %arg7: memref<1x128xf32, #tpu.memory_space<vmem>>, %arg8: memref<1x16x128xf32, #tpu.memory_space<vmem>>, %arg9: memref<18x64xbf16, #tpu.memory_space<vmem>>, %arg10: memref<18x128xbf16, #tpu.memory_space<vmem>>) attributes {dimension_semantics = [#tpu.dimension_semantics<parallel>], iteration_bounds = array<i64: 2>, scalar_prefetch = 0 : i64, scratch_operands = 2 : i64, tpu.core_type = #tpu.core_type<tc>, window_params = [{transform_indices = @transform_0, window_bounds = array<i64: 1, 16, 64>}, {pipeline_mode = #tpu.pipeline_mode<synchronous>, transform_indices = @transform_1, window_bounds = array<i64: 3, 64, 128>}, {pipeline_mode = #tpu.pipeline_mode<synchronous>, transform_indices = @transform_2, window_bounds = array<i64: 1, 128>}, {pipeline_mode = #tpu.pipeline_mode<synchronous>, transform_indices = @transform_3, window_bounds = array<i64: 3, 128, 128>}, {pipeline_mode = #tpu.pipeline_mode<synchronous>, transform_indices = @transform_4, window_bounds = array<i64: 1, 128>}, {pipeline_mode = #tpu.pipeline_mode<synchronous>, transform_indices = @transform_5, window_bounds = array<i64: 64, 128>}, {pipeline_mode = #tpu.pipeline_mode<synchronous>, transform_indices = @transform_6, window_bounds = array<i64: 1, 128>}, {transform_indices = @transform_7, window_bounds = array<i64: 1, 16, 128>}]} {
    %c0 = arith.constant 0 : index
    %c0_0 = arith.constant 0 : index
    %c0_1 = arith.constant 0 : index
    %0 = vector.load %arg1[%c0, %c0_0, %c0_1] : memref<1x16x64xf32, #tpu.memory_space<vmem>>, vector<1x16x64xf32>
    %1 = vector.shape_cast %0 : vector<1x16x64xf32> to vector<16x64xf32>
    %cst = arith.constant 0.000000e+00 : bf16
    %2 = vector.broadcast %cst : bf16 to vector<1x64xbf16>
    %c0_2 = arith.constant 0 : index
    %c0_3 = arith.constant 0 : index
    %3 = vector.load %arg9[%c0_2, %c0_3] : memref<18x64xbf16, #tpu.memory_space<vmem>>, vector<1x64xbf16>
    tpu.vector_store %arg9[%c0_2, %c0_3], %2 {strides = array<i32>} : memref<18x64xbf16, #tpu.memory_space<vmem>>, vector<1x64xbf16>,
    %cst_4 = arith.constant 0.000000e+00 : bf16
    %4 = vector.broadcast %cst_4 : bf16 to vector<1x64xbf16>
    %c17 = arith.constant 17 : index
    %c0_5 = arith.constant 0 : index
    %5 = vector.load %arg9[%c17, %c0_5] : memref<18x64xbf16, #tpu.memory_space<vmem>>, vector<1x64xbf16>
    tpu.vector_store %arg9[%c17, %c0_5], %4 {strides = array<i32>} : memref<18x64xbf16, #tpu.memory_space<vmem>>, vector<1x64xbf16>,
    %6 = arith.truncf %1 : vector<16x64xf32> to vector<16x64xbf16>
    %c1 = arith.constant 1 : index
    %c0_6 = arith.constant 0 : index
    %7 = vector.load %arg9[%c1, %c0_6] : memref<18x64xbf16, #tpu.memory_space<vmem>>, vector<16x64xbf16>
    tpu.vector_store %arg9[%c1, %c0_6], %6 {strides = array<i32>} : memref<18x64xbf16, #tpu.memory_space<vmem>>, vector<16x64xbf16>,
    %cst_7 = arith.constant 0.000000e+00 : f32
    %8 = vector.broadcast %cst_7 : f32 to vector<16x128xf32>
    %c0_8 = arith.constant 0 : index
    %c0_9 = arith.constant 0 : index
    %9 = vector.load %arg9[%c0_8, %c0_9] : memref<18x64xbf16, #tpu.memory_space<vmem>>, vector<16x64xbf16>
    %c0_10 = arith.constant 0 : index
    %c0_11 = arith.constant 0 : index
    %c0_12 = arith.constant 0 : index
    %10 = vector.load %arg2[%c0_10, %c0_11, %c0_12] : memref<3x64x128xbf16, #tpu.memory_space<vmem>>, vector<1x64x128xbf16>
    %11 = vector.shape_cast %10 : vector<1x64x128xbf16> to vector<64x128xbf16>
    %cst_13 = arith.constant dense<0.000000e+00> : vector<16x128xf32>
    %12 = tpu.matmul %9, %11, %cst_13 {dimension_numbers = #tpu.dot_dimension_numbers<[1], [0], [0], [1], [0, 0, 1, 1], [], []>} : vector<16x64xbf16>, vector<64x128xbf16>, vector<16x128xf32> -> vector<16x128xf32>
    %13 = arith.addf %8, %12 : vector<16x128xf32>
    %c1_14 = arith.constant 1 : index
    %c0_15 = arith.constant 0 : index
    %14 = vector.load %arg9[%c1_14, %c0_15] : memref<18x64xbf16, #tpu.memory_space<vmem>>, vector<16x64xbf16>
    %c1_16 = arith.constant 1 : index
    %c0_17 = arith.constant 0 : index
    %c0_18 = arith.constant 0 : index
    %15 = vector.load %arg2[%c1_16, %c0_17, %c0_18] : memref<3x64x128xbf16, #tpu.memory_space<vmem>>, vector<1x64x128xbf16>
    %16 = vector.shape_cast %15 : vector<1x64x128xbf16> to vector<64x128xbf16>
    %cst_19 = arith.constant dense<0.000000e+00> : vector<16x128xf32>
    %17 = tpu.matmul %14, %16, %cst_19 {dimension_numbers = #tpu.dot_dimension_numbers<[1], [0], [0], [1], [0, 0, 1, 1], [], []>} : vector<16x64xbf16>, vector<64x128xbf16>, vector<16x128xf32> -> vector<16x128xf32>
    %18 = arith.addf %13, %17 : vector<16x128xf32>
    %c2 = arith.constant 2 : index
    %c0_20 = arith.constant 0 : index
    %19 = vector.load %arg9[%c2, %c0_20] : memref<18x64xbf16, #tpu.memory_space<vmem>>, vector<16x64xbf16>
    %c2_21 = arith.constant 2 : index
    %c0_22 = arith.constant 0 : index
    %c0_23 = arith.constant 0 : index
    %20 = vector.load %arg2[%c2_21, %c0_22, %c0_23] : memref<3x64x128xbf16, #tpu.memory_space<vmem>>, vector<1x64x128xbf16>
    %21 = vector.shape_cast %20 : vector<1x64x128xbf16> to vector<64x128xbf16>
    %cst_24 = arith.constant dense<0.000000e+00> : vector<16x128xf32>
    %22 = tpu.matmul %19, %21, %cst_24 {dimension_numbers = #tpu.dot_dimension_numbers<[1], [0], [0], [1], [0, 0, 1, 1], [], []>} : vector<16x64xbf16>, vector<64x128xbf16>, vector<16x128xf32> -> vector<16x128xf32>
    %23 = arith.addf %18, %22 : vector<16x128xf32>
    %c0_25 = arith.constant 0 : index
    %c0_26 = arith.constant 0 : index
    %24 = vector.load %arg3[%c0_25, %c0_26] : memref<1x128xf32, #tpu.memory_space<vmem>>, vector<1x128xf32>
    %25 = vector.broadcast %24 : vector<1x128xf32> to vector<16x128xf32>
    %26 = arith.addf %23, %25 : vector<16x128xf32>
    %cst_27 = arith.constant 0.000000e+00 : f32
    %27 = vector.broadcast %cst_27 : f32 to vector<16x128xf32>
    %28 = arith.maximumf %26, %27 : vector<16x128xf32>
    %cst_28 = arith.constant 0.000000e+00 : bf16
    %29 = vector.broadcast %cst_28 : bf16 to vector<1x128xbf16>
    %c0_29 = arith.constant 0 : index
    %c0_30 = arith.constant 0 : index
    %30 = vector.load %arg10[%c0_29, %c0_30] : memref<18x128xbf16, #tpu.memory_space<vmem>>, vector<1x128xbf16>
    tpu.vector_store %arg10[%c0_29, %c0_30], %29 {strides = array<i32>} : memref<18x128xbf16, #tpu.memory_space<vmem>>, vector<1x128xbf16>,
    %cst_31 = arith.constant 0.000000e+00 : bf16
    %31 = vector.broadcast %cst_31 : bf16 to vector<1x128xbf16>
    %c17_32 = arith.constant 17 : index
    %c0_33 = arith.constant 0 : index
    %32 = vector.load %arg10[%c17_32, %c0_33] : memref<18x128xbf16, #tpu.memory_space<vmem>>, vector<1x128xbf16>
    tpu.vector_store %arg10[%c17_32, %c0_33], %31 {strides = array<i32>} : memref<18x128xbf16, #tpu.memory_space<vmem>>, vector<1x128xbf16>,
    %33 = arith.truncf %28 : vector<16x128xf32> to vector<16x128xbf16>
    %c1_34 = arith.constant 1 : index
    %c0_35 = arith.constant 0 : index
    %34 = vector.load %arg10[%c1_34, %c0_35] : memref<18x128xbf16, #tpu.memory_space<vmem>>, vector<16x128xbf16>
    tpu.vector_store %arg10[%c1_34, %c0_35], %33 {strides = array<i32>} : memref<18x128xbf16, #tpu.memory_space<vmem>>, vector<16x128xbf16>,
    %cst_36 = arith.constant 0.000000e+00 : f32
    %35 = vector.broadcast %cst_36 : f32 to vector<16x128xf32>
    %c0_37 = arith.constant 0 : index
    %c0_38 = arith.constant 0 : index
    %36 = vector.load %arg10[%c0_37, %c0_38] : memref<18x128xbf16, #tpu.memory_space<vmem>>, vector<16x128xbf16>
    %c0_39 = arith.constant 0 : index
    %c0_40 = arith.constant 0 : index
    %c0_41 = arith.constant 0 : index
    %37 = vector.load %arg4[%c0_39, %c0_40, %c0_41] : memref<3x128x128xbf16, #tpu.memory_space<vmem>>, vector<1x128x128xbf16>
    %38 = vector.shape_cast %37 : vector<1x128x128xbf16> to vector<128x128xbf16>
    %cst_42 = arith.constant dense<0.000000e+00> : vector<16x128xf32>
    %39 = tpu.matmul %36, %38, %cst_42 {dimension_numbers = #tpu.dot_dimension_numbers<[1], [0], [0], [1], [0, 0, 1, 1], [], []>} : vector<16x128xbf16>, vector<128x128xbf16>, vector<16x128xf32> -> vector<16x128xf32>
    %40 = arith.addf %35, %39 : vector<16x128xf32>
    %c1_43 = arith.constant 1 : index
    %c0_44 = arith.constant 0 : index
    %41 = vector.load %arg10[%c1_43, %c0_44] : memref<18x128xbf16, #tpu.memory_space<vmem>>, vector<16x128xbf16>
    %c1_45 = arith.constant 1 : index
    %c0_46 = arith.constant 0 : index
    %c0_47 = arith.constant 0 : index
    %42 = vector.load %arg4[%c1_45, %c0_46, %c0_47] : memref<3x128x128xbf16, #tpu.memory_space<vmem>>, vector<1x128x128xbf16>
    %43 = vector.shape_cast %42 : vector<1x128x128xbf16> to vector<128x128xbf16>
    %cst_48 = arith.constant dense<0.000000e+00> : vector<16x128xf32>
    %44 = tpu.matmul %41, %43, %cst_48 {dimension_numbers = #tpu.dot_dimension_numbers<[1], [0], [0], [1], [0, 0, 1, 1], [], []>} : vector<16x128xbf16>, vector<128x128xbf16>, vector<16x128xf32> -> vector<16x128xf32>
    %45 = arith.addf %40, %44 : vector<16x128xf32>
    %c2_49 = arith.constant 2 : index
    %c0_50 = arith.constant 0 : index
    %46 = vector.load %arg10[%c2_49, %c0_50] : memref<18x128xbf16, #tpu.memory_space<vmem>>, vector<16x128xbf16>
    %c2_51 = arith.constant 2 : index
    %c0_52 = arith.constant 0 : index
    %c0_53 = arith.constant 0 : index
    %47 = vector.load %arg4[%c2_51, %c0_52, %c0_53] : memref<3x128x128xbf16, #tpu.memory_space<vmem>>, vector<1x128x128xbf16>
    %48 = vector.shape_cast %47 : vector<1x128x128xbf16> to vector<128x128xbf16>
    %cst_54 = arith.constant dense<0.000000e+00> : vector<16x128xf32>
    %49 = tpu.matmul %46, %48, %cst_54 {dimension_numbers = #tpu.dot_dimension_numbers<[1], [0], [0], [1], [0, 0, 1, 1], [], []>} : vector<16x128xbf16>, vector<128x128xbf16>, vector<16x128xf32> -> vector<16x128xf32>
    %50 = arith.addf %45, %49 : vector<16x128xf32>
    %c0_55 = arith.constant 0 : index
    %c0_56 = arith.constant 0 : index
    %51 = vector.load %arg5[%c0_55, %c0_56] : memref<1x128xf32, #tpu.memory_space<vmem>>, vector<1x128xf32>
    %52 = vector.broadcast %51 : vector<1x128xf32> to vector<16x128xf32>
    %53 = arith.addf %50, %52 : vector<16x128xf32>
    %c1_57 = arith.constant 1 : index
    %c0_58 = arith.constant 0 : index
    %54 = vector.load %arg9[%c1_57, %c0_58] : memref<18x64xbf16, #tpu.memory_space<vmem>>, vector<16x64xbf16>
    %c0_59 = arith.constant 0 : index
    %c0_60 = arith.constant 0 : index
    %55 = vector.load %arg6[%c0_59, %c0_60] : memref<64x128xbf16, #tpu.memory_space<vmem>>, vector<64x128xbf16>
    %cst_61 = arith.constant dense<0.000000e+00> : vector<16x128xf32>
    %56 = tpu.matmul %54, %55, %cst_61 {dimension_numbers = #tpu.dot_dimension_numbers<[1], [0], [0], [1], [0, 0, 1, 1], [], []>} : vector<16x64xbf16>, vector<64x128xbf16>, vector<16x128xf32> -> vector<16x128xf32>
    %c0_62 = arith.constant 0 : index
    %c0_63 = arith.constant 0 : index
    %57 = vector.load %arg7[%c0_62, %c0_63] : memref<1x128xf32, #tpu.memory_space<vmem>>, vector<1x128xf32>
    %58 = vector.broadcast %57 : vector<1x128xf32> to vector<16x128xf32>
    %59 = arith.addf %56, %58 : vector<16x128xf32>
    %60 = arith.addf %53, %59 : vector<16x128xf32>
    %cst_64 = arith.constant 0.000000e+00 : f32
    %61 = vector.broadcast %cst_64 : f32 to vector<16x128xf32>
    %62 = arith.maximumf %60, %61 : vector<16x128xf32>
    %c0_65 = arith.constant 0 : index
    %c0_66 = arith.constant 0 : index
    %c0_67 = arith.constant 0 : index
    %63 = vector.load %arg8[%c0_65, %c0_66, %c0_67] : memref<1x16x128xf32, #tpu.memory_space<vmem>>, vector<1x16x128xf32>
    %64 = vector.shape_cast %63 : vector<1x16x128xf32> to vector<16x128xf32>
    %65 = vector.shape_cast %62 : vector<16x128xf32> to vector<1x16x128xf32>
    tpu.vector_store %arg8[%c0_65, %c0_66, %c0_67], %65 {strides = array<i32>} : memref<1x16x128xf32, #tpu.memory_space<vmem>>, vector<1x16x128xf32>,
    return
  }
  func.func @transform_0(%arg0: i32) -> (i32, i32, i32) {
    %c0_i32 = arith.constant 0 : i32
    %c0_i32_0 = arith.constant 0 : i32
    %c0_i32_1 = arith.constant 0 : i32
    return %arg0, %c0_i32, %c0_i32_0 : i32, i32, i32
  }
  func.func @transform_1(%arg0: i32) -> (i32, i32, i32) {
    %c0_i32 = arith.constant 0 : i32
    %c0_i32_0 = arith.constant 0 : i32
    %c0_i32_1 = arith.constant 0 : i32
    %c0_i32_2 = arith.constant 0 : i32
    return %c0_i32, %c0_i32_0, %c0_i32_1 : i32, i32, i32
  }
  func.func @transform_2(%arg0: i32) -> (i32, i32) {
    %c0_i32 = arith.constant 0 : i32
    %c0_i32_0 = arith.constant 0 : i32
    %c0_i32_1 = arith.constant 0 : i32
    return %c0_i32, %c0_i32_0 : i32, i32
  }
  func.func @transform_3(%arg0: i32) -> (i32, i32, i32) {
    %c0_i32 = arith.constant 0 : i32
    %c0_i32_0 = arith.constant 0 : i32
    %c0_i32_1 = arith.constant 0 : i32
    %c0_i32_2 = arith.constant 0 : i32
    return %c0_i32, %c0_i32_0, %c0_i32_1 : i32, i32, i32
  }
  func.func @transform_4(%arg0: i32) -> (i32, i32) {
    %c0_i32 = arith.constant 0 : i32
    %c0_i32_0 = arith.constant 0 : i32
    %c0_i32_1 = arith.constant 0 : i32
    return %c0_i32, %c0_i32_0 : i32, i32
  }
  func.func @transform_5(%arg0: i32) -> (i32, i32) {
    %c0_i32 = arith.constant 0 : i32
    %c0_i32_0 = arith.constant 0 : i32
    %c0_i32_1 = arith.constant 0 : i32
    return %c0_i32, %c0_i32_0 : i32, i32
  }
  func.func @transform_6(%arg0: i32) -> (i32, i32) {
    %c0_i32 = arith.constant 0 : i32
    %c0_i32_0 = arith.constant 0 : i32
    %c0_i32_1 = arith.constant 0 : i32
    return %c0_i32, %c0_i32_0 : i32, i32
  }
  func.func @transform_7(%arg0: i32) -> (i32, i32, i32) {
    %c0_i32 = arith.constant 0 : i32
    %c0_i32_0 = arith.constant 0 : i32
    %c0_i32_1 = arith.constant 0 : i32
    return %arg0, %c0_i32, %c0_i32_0 : i32, i32, i32
  }
}

</mosaic_0001>

<llo_original>
// kernel: tpu_custom_call.1
$region0: #{tpu_custom_call.1}
  #allocation0 [shape = 'u32[]', space=smem, size = 0x4, offset = 0x4, fixed_abs, tag = 'smem constant byte address 0x4 - core index']
  #allocation1 [shape = 'u32[144,128]{1,0:T(1,128)}', space=vmem, size = 0x12000, scoped, tag = 'internal scratch']
  #allocation2 [shape = 'bf16[18,64]{1,0:T(8,128)(2,1)}', space=vmem, size = 0x1800, scoped, tag = 'scratch operand']
  #allocation3 [shape = 'bf16[18,128]{1,0:T(8,128)(2,1)}', space=vmem, size = 0x1800, scoped, tag = 'scratch operand']
  %s0 = inlined_call_operand.hbm [shape: f32[2,16,64], index: 0, kind: input, shape index: {}]
  %s1 = inlined_call_operand.hbm [shape: bf16[3,64,128], index: 1, kind: input, shape index: {}]
  %s2 = inlined_call_operand.vmem [shape: f32[1,128], index: 2, kind: input, shape index: {}]
  %s3 = inlined_call_operand.hbm [shape: bf16[3,128,128], index: 3, kind: input, shape index: {}]
  %s4 = inlined_call_operand.vmem [shape: f32[1,128], index: 4, kind: input, shape index: {}]
  %s5 = inlined_call_operand.hbm [shape: bf16[64,128], index: 5, kind: input, shape index: {}]
  %s6 = inlined_call_operand.vmem [shape: f32[1,128], index: 6, kind: input, shape index: {}]
  %s7 = inlined_call_operand.hbm [shape: f32[2,16,128], index: 7, kind: output, shape index: {}]
  %s8 = sld [smem:[#allocation0]]
  $region77: #{tpu_custom_call.1} parent=0
    _
  %s10 = ssub.s32 1, %s8
  %s11 = scalar_select 0, %s10, %s8
  $region1: #{tpu_custom_call.1} parent=0
    #allocation4 [shape = 'u8[16384]{0}', space=vmem, size = 0x4000, scoped, tag = 'input window, operand 0']
    #allocation5 [shape = 's32[2]{0}', space=sflag, size = 0x8, scoped, tag = 'scoped memory for tpu_custom_call.1']
    #allocation6 [shape = 's32[2]{0}', space=sflag, size = 0x8, scoped, tag = 'scoped memory for tpu_custom_call.1']
    #allocation7 [shape = 'u8[49152]{0}', space=vmem, size = 0xc000, scoped, tag = 'input window, operand 1, single buffered']
    #allocation8 [shape = 's32[1]{0}', space=sflag, size = 0x4, scoped, tag = 'scoped memory for tpu_custom_call.1']
    #allocation9 [shape = 'u8[98304]{0}', space=vmem, size = 0x18000, scoped, tag = 'input window, operand 3, single buffered']
    #allocation10 [shape = 'u8[16384]{0}', space=vmem, size = 0x4000, scoped, tag = 'input window, operand 5, single buffered']
    #allocation11 [shape = 's32[1]{0}', space=sflag, size = 0x4, scoped, tag = 'scoped memory for tpu_custom_call.1']
    #allocation12 [shape = 'u8[16384]{0}', space=vmem, size = 0x4000, scoped, tag = 'output window, operand 0']
    %12 = vsyncpa [#allocation5], 0
    %s13 = scalar_lea.sflag [#allocation5], 1
    %14 = vsyncpa %s13, 0
    %15 = vsyncpa [#allocation8], 0
    %16 = vsyncpa [#allocation11], 0
    %17 = vsyncpa [#allocation6], 0
    %s18 = scalar_lea.sflag [#allocation6], 1
    %19 = vsyncpa %s18, 0
    loop: start=0, step=1, limit=4
    $region2: #{tpu_custom_call.1} parent=1 // loop_pre_header
      _
    $region3: #{tpu_custom_call.1} parent=1 // loop_header
      %s21 = sphi 0, %s25
      %p22 = scmp.ge.s32.totalorder %s21, 4
      %s31 = sphi 0, %s33
      %s34 = sphi 0, %s31
      %s35 = sphi 0, %s34
      %s51 = sphi 0, %s35
      %s55 = sphi 0, %s55
      %s57 = sphi 0, %s55
      %s58 = sphi 0, %s57
      %s72 = sphi 0, %s58
      %s76 = sphi 0, %s76
      %s78 = sphi 0, %s76
      %s79 = sphi 0, %s78
      %s93 = sphi 0, %s79
      %s97 = sphi 0, %s97
      %s99 = sphi 0, %s97
      %s100 = sphi 0, %s99
      %s114 = sphi 0, %s100
      %s118 = sphi 0, %s118
      %s120 = sphi 0, %s118
      %s121 = sphi 0, %s120
      %s135 = sphi 0, %s121
      %s139 = sphi 0, %s139
      %s141 = sphi 0, %s139
      %s142 = sphi 0, %s141
      %s156 = sphi 0, %s142
      %s160 = sphi 0, %s160
      %s162 = sphi 0, %s160
      %s163 = sphi 0, %s162
      %s177 = sphi 0, %s163
      %s183 = sphi 0, %s185
      %s186 = sphi 0, %s183
      %s187 = sphi 0, %s186
      %s203 = sphi 0, %s187
    $region4: #{tpu_custom_call.1} parent=1 // loop_header_branch
      %24 = sbr.rel (%p22) target = $region8
    $region5: #{tpu_custom_call.1} parent=1 // loop_body
      %s26 = ssub.s32 %s21, 1
      %s27 = ssub.s32 %s21, 2
      %s28 = sadd.s32 %s21, 1
      %s29 = ssub.s32 %s21, %s28
      %p30 = scmp.eq.s32.totalorder %s29, 0
      %s32 = sadd.s32 %s31, 1
      %s33 = scalar_select %p30, %s31, %s32
      %p36 = pneg %p30
      %p37 = scmp.eq.s32.totalorder %s21, 1
      %p38 = por %p36, %p37
      %p39 = scmp.ne.s32.totalorder %s31, %s34
      %p40 = scmp.eq.s32.totalorder %s21, 0
      %p41 = por %p39, %p40
      %p42 = scmp.ne.s32.totalorder %s31, %s34
      %p43 = scmp.eq.s32.totalorder %s26, 1
      %p44 = por %p42, %p43
      %p45 = scmp.ne.s32.totalorder %s34, %s35
      %p46 = scmp.eq.s32.totalorder %s26, 0
      %p47 = por %p45, %p46
      %p48 = scmp.ne.s32.totalorder %s34, %s35
      %p49 = scmp.eq.s32.totalorder %s27, 1
      %p50 = por %p48, %p49
      %p52 = scmp.ne.s32.totalorder %s35, %s51
      %p53 = scmp.eq.s32.totalorder %s27, 0
      %p54 = por %p52, %p53
      %s56 = sadd.s32 %s55, 1
      %p59 = scmp.eq.s32.totalorder %s21, 1
      %p60 = scmp.ne.s32.totalorder %s55, %s57
      %p61 = scmp.eq.s32.totalorder %s21, 0
      %p62 = por %p60, %p61
      %p63 = scmp.ne.s32.totalorder %s55, %s57
      %p64 = scmp.eq.s32.totalorder %s26, 1
      %p65 = por %p63, %p64
      %p66 = scmp.ne.s32.totalorder %s57, %s58
      %p67 = scmp.eq.s32.totalorder %s26, 0
      %p68 = por %p66, %p67
      %p69 = scmp.ne.s32.totalorder %s57, %s58
      %p70 = scmp.eq.s32.totalorder %s27, 1
      %p71 = por %p69, %p70
      %p73 = scmp.ne.s32.totalorder %s58, %s72
      %p74 = scmp.eq.s32.totalorder %s27, 0
      %p75 = por %p73, %p74
      %s77 = sadd.s32 %s76, 1
      %p80 = scmp.eq.s32.totalorder %s21, 1
      %p81 = scmp.ne.s32.totalorder %s76, %s78
      %p82 = scmp.eq.s32.totalorder %s21, 0
      %p83 = por %p81, %p82
      %p84 = scmp.ne.s32.totalorder %s76, %s78
      %p85 = scmp.eq.s32.totalorder %s26, 1
      %p86 = por %p84, %p85
      %p87 = scmp.ne.s32.totalorder %s78, %s79
      %p88 = scmp.eq.s32.totalorder %s26, 0
      %p89 = por %p87, %p88
      %p90 = scmp.ne.s32.totalorder %s78, %s79
      %p91 = scmp.eq.s32.totalorder %s27, 1
      %p92 = por %p90, %p91
      %p94 = scmp.ne.s32.totalorder %s79, %s93
      %p95 = scmp.eq.s32.totalorder %s27, 0
      %p96 = por %p94, %p95
      %s98 = sadd.s32 %s97, 1
      %p101 = scmp.eq.s32.totalorder %s21, 1
      %p102 = scmp.ne.s32.totalorder %s97, %s99
      %p103 = scmp.eq.s32.totalorder %s21, 0
      %p104 = por %p102, %p103
      %p105 = scmp.ne.s32.totalorder %s97, %s99
      %p106 = scmp.eq.s32.totalorder %s26, 1
      %p107 = por %p105, %p106
      %p108 = scmp.ne.s32.totalorder %s99, %s100
      %p109 = scmp.eq.s32.totalorder %s26, 0
      %p110 = por %p108, %p109
      %p111 = scmp.ne.s32.totalorder %s99, %s100
      %p112 = scmp.eq.s32.totalorder %s27, 1
      %p113 = por %p111, %p112
      %p115 = scmp.ne.s32.totalorder %s100, %s114
      %p116 = scmp.eq.s32.totalorder %s27, 0
      %p117 = por %p115, %p116
      %s119 = sadd.s32 %s118, 1
      %p122 = scmp.eq.s32.totalorder %s21, 1
      %p123 = scmp.ne.s32.totalorder %s118, %s120
      %p124 = scmp.eq.s32.totalorder %s21, 0
      %p125 = por %p123, %p124
      %p126 = scmp.ne.s32.totalorder %s118, %s120
      %p127 = scmp.eq.s32.totalorder %s26, 1
      %p128 = por %p126, %p127
      %p129 = scmp.ne.s32.totalorder %s120, %s121
      %p130 = scmp.eq.s32.totalorder %s26, 0
      %p131 = por %p129, %p130
      %p132 = scmp.ne.s32.totalorder %s120, %s121
      %p133 = scmp.eq.s32.totalorder %s27, 1
      %p134 = por %p132, %p133
      %p136 = scmp.ne.s32.totalorder %s121, %s135
      %p137 = scmp.eq.s32.totalorder %s27, 0
      %p138 = por %p136, %p137
      %s140 = sadd.s32 %s139, 1
      %p143 = scmp.eq.s32.totalorder %s21, 1
      %p144 = scmp.ne.s32.totalorder %s139, %s141
      %p145 = scmp.eq.s32.totalorder %s21, 0
      %p146 = por %p144, %p145
      %p147 = scmp.ne.s32.totalorder %s139, %s141
      %p148 = scmp.eq.s32.totalorder %s26, 1
      %p149 = por %p147, %p148
      %p150 = scmp.ne.s32.totalorder %s141, %s142
      %p151 = scmp.eq.s32.totalorder %s26, 0
      %p152 = por %p150, %p151
      %p153 = scmp.ne.s32.totalorder %s141, %s142
      %p154 = scmp.eq.s32.totalorder %s27, 1
      %p155 = por %p153, %p154
      %p157 = scmp.ne.s32.totalorder %s142, %s156
      %p158 = scmp.eq.s32.totalorder %s27, 0
      %p159 = por %p157, %p158
      %s161 = sadd.s32 %s160, 1
      %p164 = scmp.eq.s32.totalorder %s21, 1
      %p165 = scmp.ne.s32.totalorder %s160, %s162
      %p166 = scmp.eq.s32.totalorder %s21, 0
      %p167 = por %p165, %p166
      %p168 = scmp.ne.s32.totalorder %s160, %s162
      %p169 = scmp.eq.s32.totalorder %s26, 1
      %p170 = por %p168, %p169
      %p171 = scmp.ne.s32.totalorder %s162, %s163
      %p172 = scmp.eq.s32.totalorder %s26, 0
      %p173 = por %p171, %p172
      %p174 = scmp.ne.s32.totalorder %s162, %s163
      %p175 = scmp.eq.s32.totalorder %s27, 1
      %p176 = por %p174, %p175
      %p178 = scmp.ne.s32.totalorder %s163, %s177
      %p179 = scmp.eq.s32.totalorder %s27, 0
      %p180 = por %p178, %p179
      %s181 = ssub.s32 %s21, %s28
      %p182 = scmp.eq.s32.totalorder %s181, 0
      %s184 = sadd.s32 %s183, 1
      %s185 = scalar_select %p182, %s183, %s184
      %p188 = pneg %p182
      %p189 = scmp.eq.s32.totalorder %s21, 1
      %p190 = por %p188, %p189
      %p191 = scmp.ne.s32.totalorder %s183, %s186
      %p192 = scmp.eq.s32.totalorder %s21, 0
      %p193 = por %p191, %p192
      %p194 = scmp.ne.s32.totalorder %s183, %s186
      %p195 = scmp.eq.s32.totalorder %s26, 1
      %p196 = por %p194, %p195
      %p197 = scmp.ne.s32.totalorder %s186, %s187
      %p198 = scmp.eq.s32.totalorder %s26, 0
      %p199 = por %p197, %p198
      %p200 = scmp.ne.s32.totalorder %s186, %s187
      %p201 = scmp.eq.s32.totalorder %s27, 1
      %p202 = por %p200, %p201
      %p204 = scmp.ne.s32.totalorder %s187, %s203
      %p205 = scmp.eq.s32.totalorder %s27, 0
      %p206 = por %p204, %p205
      %p207 = scmp.le.s32.totalorder 1, %s21
      %p208 = scmp.lt.s32.totalorder %s21, 3
      %p209 = pnand %p207, %p208
      %p210 = pneg %p209
      // Predicated region
      $region9: #{tpu_custom_call.1} parent=5 // pred_check
        _
      $region10: #{tpu_custom_call.1} parent=5 // pred_check_branch
        %212 = sbr.rel (%p209) target = $region12
      $region11: #{tpu_custom_call.1} parent=5 // pred_region
        %s213 = ssub.s32 %s21, 1
        // Predicated region
        $region13: #{tpu_custom_call.1} parent=11 // pred_check
          %p214 = pneg %p68
        $region14: #{tpu_custom_call.1} parent=11 // pred_check_branch
          %216 = sbr.rel (%p214) target = $region16
        $region15: #{tpu_custom_call.1} parent=11 // pred_region
          %s218 = ssub.s32 1536, 1536
          %219 = vsyncadd [#allocation8], %s218
          %s220 = sshll.u32 [#allocation7], 4
          %s221 = int_to_ptr.vmem [resolvable:$true] %s220
          %226 = dma.hbm_to_vmem [thread:$0]  %s1, 1536, %s221, [#allocation8], 64, 64, 4
        $region16: #{tpu_custom_call.1} parent=11 // pred_fallthru
          _
        // Predicated region
        $region17: #{tpu_custom_call.1} parent=11 // pred_check
          %p227 = pneg %p89
        $region18: #{tpu_custom_call.1} parent=11 // pred_check_branch
          %229 = sbr.rel (%p227) target = $region20
        $region19: #{tpu_custom_call.1} parent=11 // pred_region
          _
        $region20: #{tpu_custom_call.1} parent=11 // pred_fallthru
          _
        // Predicated region
        $region21: #{tpu_custom_call.1} parent=11 // pred_check
          %p230 = pneg %p110
        $region22: #{tpu_custom_call.1} parent=11 // pred_check_branch
          %232 = sbr.rel (%p230) target = $region24
        $region23: #{tpu_custom_call.1} parent=11 // pred_region
          %s234 = ssub.s32 3072, 3072
          %235 = vsyncadd [#allocation8], %s234
          %s236 = sshll.u32 [#allocation9], 4
          %s237 = int_to_ptr.vmem [resolvable:$true] %s236
          %242 = dma.hbm_to_vmem [thread:$0]  %s3, 3072, %s237, [#allocation8], 64, 64, 4
        $region24: #{tpu_custom_call.1} parent=11 // pred_fallthru
          _
        // Predicated region
        $region25: #{tpu_custom_call.1} parent=11 // pred_check
          %p243 = pneg %p131
        $region26: #{tpu_custom_call.1} parent=11 // pred_check_branch
          %245 = sbr.rel (%p243) target = $region28
        $region27: #{tpu_custom_call.1} parent=11 // pred_region
          _
        $region28: #{tpu_custom_call.1} parent=11 // pred_fallthru
          _
        // Predicated region
        $region29: #{tpu_custom_call.1} parent=11 // pred_check
          %p246 = pneg %p152
        $region30: #{tpu_custom_call.1} parent=11 // pred_check_branch
          %248 = sbr.rel (%p246) target = $region32
        $region31: #{tpu_custom_call.1} parent=11 // pred_region
          %s250 = ssub.s32 512, 512
          %251 = vsyncadd [#allocation11], %s250
          %s252 = sshll.u32 [#allocation10], 4
          %s253 = int_to_ptr.vmem [resolvable:$true] %s252
          %258 = dma.hbm_to_vmem [thread:$0]  %s5, 512, %s253, [#allocation11], 64, 64, 4
        $region32: #{tpu_custom_call.1} parent=11 // pred_fallthru
          _
        // Predicated region
        $region33: #{tpu_custom_call.1} parent=11 // pred_check
          %p259 = pneg %p173
        $region34: #{tpu_custom_call.1} parent=11 // pred_check_branch
          %261 = sbr.rel (%p259) target = $region36
        $region35: #{tpu_custom_call.1} parent=11 // pred_region
          _
        $region36: #{tpu_custom_call.1} parent=11 // pred_fallthru
          _
      $region12: #{tpu_custom_call.1} parent=5 // pred_fallthru
        _
      %p262 = scmp.lt.s32.totalorder %s21, 2
      // Predicated region
      $region37: #{tpu_custom_call.1} parent=5 // pred_check
        %p263 = pneg %p262
      $region38: #{tpu_custom_call.1} parent=5 // pred_check_branch
        %265 = sbr.rel (%p263) target = $region40
      $region39: #{tpu_custom_call.1} parent=5 // pred_region
        // Predicated region
        $region41: #{tpu_custom_call.1} parent=39 // pred_check
          %p266 = pneg %p41
        $region42: #{tpu_custom_call.1} parent=39 // pred_check_branch
          %268 = sbr.rel (%p266) target = $region44
        $region43: #{tpu_custom_call.1} parent=39 // pred_region
          %s269 = sand.u32 %s31, 1
          %s270 = scalar_lea.sflag [#allocation5], %s269
          %s271 = sand.u32 %s31, 1
          %s272 = smul.addr %s271, 16
          %s273 = scalar_lea.vmem [#allocation4], %s272
          %s275 = ssub.s32 256, 256
          %276 = vsyncadd %s270, %s275
          %s277 = smul.addr %s21, 2
          %s278 = smul.addr %s277, 128
          %s279 = scalar_lea.hbm %s0, %s278
          %s280 = sshll.u32 %s273, 4
          %s281 = int_to_ptr.vmem [resolvable:$true] %s280
          %286 = dma.hbm_to_vmem [thread:$0]  %s279, 256, %s281, %s270, 128, 128, 8
        $region44: #{tpu_custom_call.1} parent=39 // pred_fallthru
          _
      $region40: #{tpu_custom_call.1} parent=5 // pred_fallthru
        _
      %p287 = scmp.le.s32.totalorder 1, %s21
      %p288 = scmp.lt.s32.totalorder %s21, 3
      %p289 = pnand %p287, %p288
      %p290 = pneg %p289
      // Predicated region
      $region45: #{tpu_custom_call.1} parent=5 // pred_check
        _
      $region46: #{tpu_custom_call.1} parent=5 // pred_check_branch
        %292 = sbr.rel (%p289) target = $region48
      $region47: #{tpu_custom_call.1} parent=5 // pred_region
        %s293 = ssub.s32 %s21, 1
        %s294 = sand.u32 %s34, 1
        %s295 = scalar_lea.sflag [#allocation5], %s294
        %s296 = sand.u32 %s34, 1
        %s297 = smul.addr %s296, 16
        %s298 = scalar_lea.vmem [#allocation4], %s297
        // Predicated region
        $region49: #{tpu_custom_call.1} parent=47 // pred_check
          %p299 = pneg %p47
        $region50: #{tpu_custom_call.1} parent=47 // pred_check_branch
          %301 = sbr.rel (%p299) target = $region52
        $region51: #{tpu_custom_call.1} parent=47 // pred_region
          %302 = dma.done %s295, 256
        $region52: #{tpu_custom_call.1} parent=47 // pred_fallthru
          _
        // Predicated region
        $region53: #{tpu_custom_call.1} parent=47 // pred_check
          %p303 = pneg %p68
        $region54: #{tpu_custom_call.1} parent=47 // pred_check_branch
          %305 = sbr.rel (%p303) target = $region56
        $region55: #{tpu_custom_call.1} parent=47 // pred_region
          %306 = dma.done [#allocation8], 1536
        $region56: #{tpu_custom_call.1} parent=47 // pred_fallthru
          _
        // Predicated region
        $region57: #{tpu_custom_call.1} parent=47 // pred_check
          %p307 = pneg %p110
        $region58: #{tpu_custom_call.1} parent=47 // pred_check_branch
          %309 = sbr.rel (%p307) target = $region60
        $region59: #{tpu_custom_call.1} parent=47 // pred_region
          %310 = dma.done [#allocation8], 3072
        $region60: #{tpu_custom_call.1} parent=47 // pred_fallthru
          _
        // Predicated region
        $region61: #{tpu_custom_call.1} parent=47 // pred_check
          %p311 = pneg %p152
        $region62: #{tpu_custom_call.1} parent=47 // pred_check_branch
          %313 = sbr.rel (%p311) target = $region64
        $region63: #{tpu_custom_call.1} parent=47 // pred_region
          %314 = dma.done [#allocation11], 512
        $region64: #{tpu_custom_call.1} parent=47 // pred_fallthru
          _
        %s315 = sand.u32 %s34, 1
        %s316 = scalar_lea.sflag [#allocation5], %s315
        %s317 = sand.u32 %s34, 1
        %s318 = smul.addr %s317, 16
        %s319 = scalar_lea.vmem [#allocation4], %s318
        %p320 = pneg %p47
        %p321 = pneg %p44
        %p322 = pneg %p68
        %p323 = pneg %p65
        %p324 = pneg %p89
        %p325 = pneg %p86
        %p326 = pneg %p110
        %p327 = pneg %p107
        %p328 = pneg %p131
        %p329 = pneg %p128
        %p330 = pneg %p152
        %p331 = pneg %p149
        %p332 = pneg %p173
        %p333 = pneg %p170
        %p334 = pneg %p199
        %p335 = pneg %p196
        %s336 = sand.u32 %s186, 1
        %s337 = scalar_lea.sflag [#allocation6], %s336
        %s338 = sand.u32 %s186, 1
        %s339 = smul.addr %s338, 16
        %s340 = scalar_lea.vmem [#allocation12], %s339
        %v342 = vld [vmem:[%s298] sm:$0xff]
        %v343 = vld [vmem:[%s298 + $0x8] sm:$0xff]
        %vm344 = vcmask 516096
        %vm345 = vsmask.f32 256
        %vm346 = vmand %vm344, %vm345
        %v347 = vld [vmem:[#allocation2] sm:$0x1]
        %v348 = vsel %vm346, 0, %v347
        %349 = vst [vmem:[#allocation2] sm:$0x1] %v348
        %vm350 = vsmask.f32 7938
        %vm351 = vmand %vm344, %vm350
        %v352 = vld [vmem:[#allocation2 + $0x8] sm:$0x1]
        %v353 = vsel %vm351, 0, %v352
        %354 = vst [vmem:[#allocation2 + $0x8] sm:$0x1] %v353
        %v355 = vpack.c.bf16 %v343, %v342
        %v357 = vunpack.c.l.b16 %v355
        %v358 = vunpack.c.h.b16 %v355
        %v359 = vpack.c.b16 %v357, %v357
        %v360 = vpack.c.b16 %v358, %v358
        %vm361 = vsmask.f32 4368
        %vm362 = vmor %vm345, %vm361
        %v364 = vshrl.u32 %v359, 16
        %v366 = vrot.slane %v364, 7
        %v367 = vshll.u32 %v359, 16
        %v369 = vor.u32 %v366, %v367
        %v370 = vrot.slane %v366, 4
        %v372 = vshrl.u32 %v360, 16
        %v374 = vrot.slane %v372, 7
        %v375 = vshll.u32 %v360, 16
        %v377 = vor.u32 %v374, %v375
        %v378 = vsel %vm362, %v370, %v377
        %v379 = vrot.slane %v374, 4
        %vm383 = vcmask 519168
        %vm384 = vmand %vm383, %vm350
        %v385 = vld [vmem:[#allocation2] sm:$0xf]
        %v386 = vsel %vm384, %v369, %v385
        %387 = vst [vmem:[#allocation2] sm:$0xf] %v386
        %vm388 = vcmask 519168
        %389 = vst.msk [vmem:[#allocation2 + $0x4] sm:$0xf] %vm388, %v378
        %v390 = vld [vmem:[#allocation2 + $0x8] sm:$0x1]
        %v391 = vsel %vm346, %v379, %v390
        %392 = vst [vmem:[#allocation2 + $0x8] sm:$0x1] %v391
        %v393 = vld [vmem:[#allocation2] sm:$0xf]
        %v394 = vld [vmem:[#allocation2 + $0x4] sm:$0xf]
        %v395 = vld [vmem:[#allocation7] sm:$0xf]
        %v396 = vld [vmem:[#allocation7 + $0x4] sm:$0xf]
        %v397 = vld [vmem:[#allocation7 + $0x8] sm:$0xf]
        %v398 = vld [vmem:[#allocation7 + $0xc] sm:$0xf]
        %v399 = vld [vmem:[#allocation7 + $0x10] sm:$0xf]
        %v400 = vld [vmem:[#allocation7 + $0x14] sm:$0xf]
        %v401 = vld [vmem:[#allocation7 + $0x18] sm:$0xf]
        %v402 = vld [vmem:[#allocation7 + $0x1c] sm:$0xf]
        %v403 = vld [vmem:[#allocation2 + $0x8] sm:$0x1]
        %s404 = scalar_lea.vmem [#allocation7], 32
        %v405 = vld [vmem:[%s404] sm:$0xf]
        %v406 = vld [vmem:[%s404 + $0x4] sm:$0xf]
        %v407 = vld [vmem:[%s404 + $0x8] sm:$0xf]
        %v408 = vld [vmem:[%s404 + $0xc] sm:$0xf]
        %v409 = vld [vmem:[%s404 + $0x10] sm:$0xf]
        %v410 = vld [vmem:[%s404 + $0x14] sm:$0xf]
        %v411 = vld [vmem:[%s404 + $0x18] sm:$0xf]
        %v412 = vld [vmem:[%s404 + $0x1c] sm:$0xf]
        %v416 = vunpack.c.l.b16 %v393
        %v417 = vunpack.c.l.b16 %v394
        %v418 = vunpack.c.l.b16 %v403
        %v419 = vpack.c.b16 %v417, %v416
        %v420 = vpack.c.b16 %v418, %v418
        %vm421 = vsmask.f32 7424
        %v423 = vshrl.u32 %v419, 16
        %v425 = vshll.u32 %v419, 16
        %v427 = vrot.slane %v425, 1
        %v428 = vor.u32 %v423, %v427
        %v430 = vshll.u32 %v420, 16
        %v432 = vrot.slane %v430, 1
        %v433 = vsel %vm421, %v428, %v432
        %v442 = vunpack.c.l.b16 %v405
        %v443 = vunpack.c.l.b16 %v406
        %v444 = vunpack.c.l.b16 %v407
        %v445 = vunpack.c.l.b16 %v408
        %v446 = vunpack.c.l.b16 %v409
        %v447 = vunpack.c.l.b16 %v410
        %v448 = vunpack.c.l.b16 %v411
        %v449 = vunpack.c.l.b16 %v412
        %v450 = vpack.c.b16 %v443, %v442
        %v451 = vpack.c.b16 %v445, %v444
        %v452 = vpack.c.b16 %v447, %v446
        %v453 = vpack.c.b16 %v449, %v448
        %vm458 = vcmask 523264
        %v460 = vsel %vm458, %v433, 0
        %462 = vmatprep.subr.bf16.mxu0 0
        %463 = vmatpush1.bf16.msra.mxu0 %v450
        %464 = vmatprep.subr.bf16.mxu0 0
        %465 = vmatpush1.bf16.msra.mxu0 %v451
        %466 = vmatprep.subr.bf16.mxu0 0
        %467 = vmatpush1.bf16.msra.mxu0 %v452
        %468 = vmatprep.subr.bf16.mxu0 0
        %469 = vmatpush1.bf16.msra.mxu0 %v453
        %470 = vmatprep.subr.bf16.mxu0 0
        %471 = vmatpush1.bf16.msra.mxu0 0
        %472 = vmatprep.subr.bf16.mxu0 0
        %473 = vmatpush1.bf16.msra.mxu0 0
        %474 = vmatprep.subr.bf16.mxu0 0
        %475 = vmatpush1.bf16.msra.mxu0 0
        %476 = vmatprep.subr.bf16.mxu0 0
        %477 = vmatpush1.bf16.msra.mxu0 0
        %478 = vmatprep.subr.bf16.mxu0 0
        %479 = vmatpush1.bf16.msra.mxu0 0
        %480 = vmatprep.subr.bf16.mxu0 0
        %481 = vmatpush1.bf16.msra.mxu0 0
        %482 = vmatprep.subr.bf16.mxu0 0
        %483 = vmatpush1.bf16.msra.mxu0 0
        %484 = vmatprep.subr.bf16.mxu0 0
        %485 = vmatpush1.bf16.msra.mxu0 0
        %486 = vmatprep.subr.bf16.mxu0 0
        %487 = vmatpush1.bf16.msra.mxu0 0
        %488 = vmatprep.subr.bf16.mxu0 0
        %489 = vmatpush1.bf16.msra.mxu0 0
        %490 = vmatprep.subr.bf16.mxu0 0
        %491 = vmatpush1.bf16.msra.mxu0 0
        %492 = vmatprep.subr.bf16.mxu0 0
        %493 = vmatpush1.bf16.msra.mxu0 0
        %494 = vmatprep.mubr.bf16.mxu0 0
        %495 = vmatmul.mubr.bf16.gmra.mrb[0].mxu0 %v460
        %v496 = vpop.f32.mrb[0].mxu0
        %v497 = vadd.f32 0.0, %v496
        %v498 = vpop.f32.mrb[0].mxu0
        %v499 = vpop.f32.mrb[0].mxu0
        %v500 = vadd.f32 0.0, %v499
        %v501 = vpop.f32.mrb[0].mxu0
        %502 = vdwg.mxu0
        %v511 = vunpack.c.l.b16 %v395
        %v512 = vunpack.c.l.b16 %v396
        %v513 = vunpack.c.l.b16 %v397
        %v514 = vunpack.c.l.b16 %v398
        %v515 = vunpack.c.l.b16 %v399
        %v516 = vunpack.c.l.b16 %v400
        %v517 = vunpack.c.l.b16 %v401
        %v518 = vunpack.c.l.b16 %v402
        %v519 = vpack.c.b16 %v512, %v511
        %v520 = vpack.c.b16 %v514, %v513
        %v521 = vpack.c.b16 %v516, %v515
        %v522 = vpack.c.b16 %v518, %v517
        %v527 = vsel %vm458, %v419, 0
        %529 = vmatprep.subr.bf16.mxu0 0
        %530 = vmatpush1.bf16.msra.mxu0 %v519
        %531 = vmatprep.subr.bf16.mxu0 0
        %532 = vmatpush1.bf16.msra.mxu0 %v520
        %533 = vmatprep.subr.bf16.mxu0 0
        %534 = vmatpush1.bf16.msra.mxu0 %v521
        %535 = vmatprep.subr.bf16.mxu0 0
        %536 = vmatpush1.bf16.msra.mxu0 %v522
        %537 = vmatprep.subr.bf16.mxu0 0
        %538 = vmatpush1.bf16.msra.mxu0 0
        %539 = vmatprep.subr.bf16.mxu0 0
        %540 = vmatpush1.bf16.msra.mxu0 0
        %541 = vmatprep.subr.bf16.mxu0 0
        %542 = vmatpush1.bf16.msra.mxu0 0
        %543 = vmatprep.subr.bf16.mxu0 0
        %544 = vmatpush1.bf16.msra.mxu0 0
        %545 = vmatprep.subr.bf16.mxu0 0
        %546 = vmatpush1.bf16.msra.mxu0 0
        %547 = vmatprep.subr.bf16.mxu0 0
        %548 = vmatpush1.bf16.msra.mxu0 0
        %549 = vmatprep.subr.bf16.mxu0 0
        %550 = vmatpush1.bf16.msra.mxu0 0
        %551 = vmatprep.subr.bf16.mxu0 0
        %552 = vmatpush1.bf16.msra.mxu0 0
        %553 = vmatprep.subr.bf16.mxu0 0
        %554 = vmatpush1.bf16.msra.mxu0 0
        %555 = vmatprep.subr.bf16.mxu0 0
        %556 = vmatpush1.bf16.msra.mxu0 0
        %557 = vmatprep.subr.bf16.mxu0 0
        %558 = vmatpush1.bf16.msra.mxu0 0
        %559 = vmatprep.subr.bf16.mxu0 0
        %560 = vmatpush1.bf16.msra.mxu0 0
        %561 = vmatprep.mubr.bf16.mxu0 0
        %562 = vmatmul.mubr.bf16.gmra.mrb[0].mxu0 %v527
        %v563 = vpop.f32.mrb[0].mxu0
        %v564 = vadd.f32 %v497, %v563
        %v565 = vpop.f32.mrb[0].mxu0
        %v566 = vpop.f32.mrb[0].mxu0
        %v567 = vadd.f32 %v500, %v566
        %v568 = vpop.f32.mrb[0].mxu0
        %569 = vdwg.mxu0
        %v570 = vld [vmem:[#allocation2] sm:$0xe]
        %s571 = scalar_lea.vmem [#allocation7], 64
        %v572 = vld [vmem:[%s571] sm:$0xf]
        %v573 = vld [vmem:[%s571 + $0x4] sm:$0xf]
        %v574 = vld [vmem:[%s571 + $0x8] sm:$0xf]
        %v575 = vld [vmem:[%s571 + $0xc] sm:$0xf]
        %v576 = vld [vmem:[%s571 + $0x10] sm:$0xf]
        %v577 = vld [vmem:[%s571 + $0x14] sm:$0xf]
        %v578 = vld [vmem:[%s571 + $0x18] sm:$0xf]
        %v579 = vld [vmem:[%s571 + $0x1c] sm:$0xf]
        %v581 = vunpack.c.l.b16 %v570
        %v582 = vpack.c.b16 %v417, %v581
        %vm583 = vcmask 1046528
        %v584 = vrot.slane %v582, 1
        %v585 = vrot.slane %v420, 1
        %v586 = vsel %vm583, %v584, %v585
        %v595 = vunpack.c.l.b16 %v572
        %v596 = vunpack.c.l.b16 %v573
        %v597 = vunpack.c.l.b16 %v574
        %v598 = vunpack.c.l.b16 %v575
        %v599 = vunpack.c.l.b16 %v576
        %v600 = vunpack.c.l.b16 %v577
        %v601 = vunpack.c.l.b16 %v578
        %v602 = vunpack.c.l.b16 %v579
        %v603 = vpack.c.b16 %v596, %v595
        %v604 = vpack.c.b16 %v598, %v597
        %v605 = vpack.c.b16 %v600, %v599
        %v606 = vpack.c.b16 %v602, %v601
        %v612 = vsel %vm458, %v586, 0
        %614 = vmatprep.subr.bf16.mxu0 0
        %615 = vmatpush1.bf16.msra.mxu0 %v603
        %616 = vmatprep.subr.bf16.mxu0 0
        %617 = vmatpush1.bf16.msra.mxu0 %v604
        %618 = vmatprep.subr.bf16.mxu0 0
        %619 = vmatpush1.bf16.msra.mxu0 %v605
        %620 = vmatprep.subr.bf16.mxu0 0
        %621 = vmatpush1.bf16.msra.mxu0 %v606
        %622 = vmatprep.subr.bf16.mxu0 0
        %623 = vmatpush1.bf16.msra.mxu0 0
        %624 = vmatprep.subr.bf16.mxu0 0
        %625 = vmatpush1.bf16.msra.mxu0 0
        %626 = vmatprep.subr.bf16.mxu0 0
        %627 = vmatpush1.bf16.msra.mxu0 0
        %628 = vmatprep.subr.bf16.mxu0 0
        %629 = vmatpush1.bf16.msra.mxu0 0
        %630 = vmatprep.subr.bf16.mxu0 0
        %631 = vmatpush1.bf16.msra.mxu0 0
        %632 = vmatprep.subr.bf16.mxu0 0
        %633 = vmatpush1.bf16.msra.mxu0 0
        %634 = vmatprep.subr.bf16.mxu0 0
        %635 = vmatpush1.bf16.msra.mxu0 0
        %636 = vmatprep.subr.bf16.mxu0 0
        %637 = vmatpush1.bf16.msra.mxu0 0
        %638 = vmatprep.subr.bf16.mxu0 0
        %639 = vmatpush1.bf16.msra.mxu0 0
        %640 = vmatprep.subr.bf16.mxu0 0
        %641 = vmatpush1.bf16.msra.mxu0 0
        %642 = vmatprep.subr.bf16.mxu0 0
        %643 = vmatpush1.bf16.msra.mxu0 0
        %644 = vmatprep.subr.bf16.mxu0 0
        %645 = vmatpush1.bf16.msra.mxu0 0
        %646 = vmatprep.mubr.bf16.mxu0 0
        %647 = vmatmul.mubr.bf16.gmra.mrb[0].mxu0 %v612
        %v648 = vpop.f32.mrb[0].mxu0
        %v649 = vadd.f32 0.0, %v648
        %v650 = vpop.f32.mrb[0].mxu0
        %v651 = vpop.f32.mrb[0].mxu0
        %v652 = vadd.f32 0.0, %v651
        %v653 = vpop.f32.mrb[0].mxu0
        %654 = vdwg.mxu0
        %v655 = vadd.f32 %v564, %v649
        %v656 = vadd.f32 %v567, %v652
        %v657 = vld [vmem:[%s2] sm:$0x1]
        %v659 = vlaneseq
        %v660 = vshrl.u32 %v659, 7
        %v661 = vsub.s32 0, %v660
        %v662 = vrot.slane %v657, %v661
        %v664 = vadd.f32 %v655, %v662
        %v665 = vadd.f32 %v656, %v662
        %v666 = vmax.f32 %v664, 0.0
        %v667 = vmax.f32 %v665, 0.0
        %vm668 = vcmask 1040384
        %vm669 = vmand %vm668, %vm345
        %v670 = vld [vmem:[#allocation3] sm:$0x1]
        %v671 = vsel %vm669, 0, %v670
        %672 = vst [vmem:[#allocation3] sm:$0x1] %v671
        %vm673 = vmand %vm668, %vm350
        %v674 = vld [vmem:[#allocation3 + $0x8] sm:$0x1]
        %v675 = vsel %vm673, 0, %v674
        %676 = vst [vmem:[#allocation3 + $0x8] sm:$0x1] %v675
        %v677 = vpack.c.bf16 %v667, %v666
        %v679 = vunpack.c.l.b16 %v677
        %v680 = vunpack.c.h.b16 %v677
        %v681 = vpack.c.b16 %v679, %v679
        %v682 = vpack.c.b16 %v680, %v680
        %v684 = vshrl.u32 %v681, 16
        %v686 = vrot.slane %v684, 7
        %v687 = vshll.u32 %v681, 16
        %v689 = vor.u32 %v686, %v687
        %v690 = vrot.slane %v686, 4
        %v692 = vshrl.u32 %v682, 16
        %v694 = vrot.slane %v692, 7
        %v695 = vshll.u32 %v682, 16
        %v697 = vor.u32 %v694, %v695
        %v698 = vsel %vm362, %v690, %v697
        %v699 = vrot.slane %v694, 4
        %vm703 = vcmask 1043456
        %vm704 = vmand %vm703, %vm350
        %v705 = vld [vmem:[#allocation3] sm:$0xf]
        %v706 = vsel %vm704, %v689, %v705
        %707 = vst [vmem:[#allocation3] sm:$0xf] %v706
        %708 = vst [vmem:[#allocation3 + $0x4] sm:$0xf] %v698
        %v709 = vld [vmem:[#allocation3 + $0x8] sm:$0x1]
        %v710 = vsel %vm669, %v699, %v709
        %711 = vst [vmem:[#allocation3 + $0x8] sm:$0x1] %v710
        %v712 = vld [vmem:[#allocation3] sm:$0xf]
        %v713 = vld [vmem:[#allocation3 + $0x4] sm:$0xf]
        %v714 = vld [vmem:[#allocation9] sm:$0xf]
        %v715 = vld [vmem:[#allocation9 + $0x4] sm:$0xf]
        %v716 = vld [vmem:[#allocation9 + $0x8] sm:$0xf]
        %v717 = vld [vmem:[#allocation9 + $0xc] sm:$0xf]
        %v718 = vld [vmem:[#allocation9 + $0x10] sm:$0xf]
        %v719 = vld [vmem:[#allocation9 + $0x14] sm:$0xf]
        %v720 = vld [vmem:[#allocation9 + $0x18] sm:$0xf]
        %v721 = vld [vmem:[#allocation9 + $0x1c] sm:$0xf]
        %v722 = vld [vmem:[#allocation9 + $0x20] sm:$0xf]
        %v723 = vld [vmem:[#allocation9 + $0x24] sm:$0xf]
        %v724 = vld [vmem:[#allocation9 + $0x28] sm:$0xf]
        %v725 = vld [vmem:[#allocation9 + $0x2c] sm:$0xf]
        %v726 = vld [vmem:[#allocation9 + $0x30] sm:$0xf]
        %v727 = vld [vmem:[#allocation9 + $0x34] sm:$0xf]
        %v728 = vld [vmem:[#allocation9 + $0x38] sm:$0xf]
        %v729 = vld [vmem:[#allocation9 + $0x3c] sm:$0xf]
        %v730 = vld [vmem:[#allocation3 + $0x8] sm:$0x1]
        %s731 = scalar_lea.vmem [#allocation9], 64
        %v732 = vld [vmem:[%s731] sm:$0xf]
        %v733 = vld [vmem:[%s731 + $0x4] sm:$0xf]
        %v734 = vld [vmem:[%s731 + $0x8] sm:$0xf]
        %v735 = vld [vmem:[%s731 + $0xc] sm:$0xf]
        %v736 = vld [vmem:[%s731 + $0x10] sm:$0xf]
        %v737 = vld [vmem:[%s731 + $0x14] sm:$0xf]
        %v738 = vld [vmem:[%s731 + $0x18] sm:$0xf]
        %v739 = vld [vmem:[%s731 + $0x1c] sm:$0xf]
        %v740 = vld [vmem:[%s731 + $0x20] sm:$0xf]
        %v741 = vld [vmem:[%s731 + $0x24] sm:$0xf]
        %v742 = vld [vmem:[%s731 + $0x28] sm:$0xf]
        %v743 = vld [vmem:[%s731 + $0x2c] sm:$0xf]
        %v744 = vld [vmem:[%s731 + $0x30] sm:$0xf]
        %v745 = vld [vmem:[%s731 + $0x34] sm:$0xf]
        %v746 = vld [vmem:[%s731 + $0x38] sm:$0xf]
        %v747 = vld [vmem:[%s731 + $0x3c] sm:$0xf]
        %v751 = vunpack.c.l.b16 %v712
        %v752 = vunpack.c.l.b16 %v713
        %v753 = vunpack.c.l.b16 %v730
        %v754 = vpack.c.b16 %v752, %v751
        %v755 = vpack.c.b16 %v753, %v753
        %v757 = vshrl.u32 %v754, 16
        %v759 = vshll.u32 %v754, 16
        %v761 = vrot.slane %v759, 1
        %v762 = vor.u32 %v757, %v761
        %v764 = vshll.u32 %v755, 16
        %v766 = vrot.slane %v764, 1
        %v767 = vsel %vm421, %v762, %v766
        %v785 = vunpack.c.l.b16 %v732
        %v786 = vunpack.c.l.b16 %v733
        %v787 = vunpack.c.l.b16 %v734
        %v788 = vunpack.c.l.b16 %v735
        %v789 = vunpack.c.l.b16 %v736
        %v790 = vunpack.c.l.b16 %v737
        %v791 = vunpack.c.l.b16 %v738
        %v792 = vunpack.c.l.b16 %v739
        %v793 = vunpack.c.l.b16 %v740
        %v794 = vunpack.c.l.b16 %v741
        %v795 = vunpack.c.l.b16 %v742
        %v796 = vunpack.c.l.b16 %v743
        %v797 = vunpack.c.l.b16 %v744
        %v798 = vunpack.c.l.b16 %v745
        %v799 = vunpack.c.l.b16 %v746
        %v800 = vunpack.c.l.b16 %v747
        %v801 = vpack.c.b16 %v786, %v785
        %v802 = vpack.c.b16 %v788, %v787
        %v803 = vpack.c.b16 %v790, %v789
        %v804 = vpack.c.b16 %v792, %v791
        %v805 = vpack.c.b16 %v794, %v793
        %v806 = vpack.c.b16 %v796, %v795
        %v807 = vpack.c.b16 %v798, %v797
        %v808 = vpack.c.b16 %v800, %v799
        %817 = vmatprep.subr.bf16.mxu0 0
        %818 = vmatpush1.bf16.msra.mxu0 %v801
        %819 = vmatprep.subr.bf16.mxu0 0
        %820 = vmatpush1.bf16.msra.mxu0 %v802
        %821 = vmatprep.subr.bf16.mxu0 0
        %822 = vmatpush1.bf16.msra.mxu0 %v803
        %823 = vmatprep.subr.bf16.mxu0 0
        %824 = vmatpush1.bf16.msra.mxu0 %v804
        %825 = vmatprep.subr.bf16.mxu0 0
        %826 = vmatpush1.bf16.msra.mxu0 %v805
        %827 = vmatprep.subr.bf16.mxu0 0
        %828 = vmatpush1.bf16.msra.mxu0 %v806
        %829 = vmatprep.subr.bf16.mxu0 0
        %830 = vmatpush1.bf16.msra.mxu0 %v807
        %831 = vmatprep.subr.bf16.mxu0 0
        %832 = vmatpush1.bf16.msra.mxu0 %v808
        %833 = vmatprep.subr.bf16.mxu0 0
        %834 = vmatpush1.bf16.msra.mxu0 0
        %835 = vmatprep.subr.bf16.mxu0 0
        %836 = vmatpush1.bf16.msra.mxu0 0
        %837 = vmatprep.subr.bf16.mxu0 0
        %838 = vmatpush1.bf16.msra.mxu0 0
        %839 = vmatprep.subr.bf16.mxu0 0
        %840 = vmatpush1.bf16.msra.mxu0 0
        %841 = vmatprep.subr.bf16.mxu0 0
        %842 = vmatpush1.bf16.msra.mxu0 0
        %843 = vmatprep.subr.bf16.mxu0 0
        %844 = vmatpush1.bf16.msra.mxu0 0
        %845 = vmatprep.subr.bf16.mxu0 0
        %846 = vmatpush1.bf16.msra.mxu0 0
        %847 = vmatprep.subr.bf16.mxu0 0
        %848 = vmatpush1.bf16.msra.mxu0 0
        %849 = vmatprep.mubr.bf16.mxu0 0
        %850 = vmatmul.mubr.bf16.gmra.mrb[0].mxu0 %v767
        %v851 = vpop.f32.mrb[0].mxu0
        %v852 = vadd.f32 0.0, %v851
        %v853 = vpop.f32.mrb[0].mxu0
        %v854 = vpop.f32.mrb[0].mxu0
        %v855 = vadd.f32 0.0, %v854
        %v856 = vpop.f32.mrb[0].mxu0
        %857 = vdwg.mxu0
        %v875 = vunpack.c.l.b16 %v714
        %v876 = vunpack.c.l.b16 %v715
        %v877 = vunpack.c.l.b16 %v716
        %v878 = vunpack.c.l.b16 %v717
        %v879 = vunpack.c.l.b16 %v718
        %v880 = vunpack.c.l.b16 %v719
        %v881 = vunpack.c.l.b16 %v720
        %v882 = vunpack.c.l.b16 %v721
        %v883 = vunpack.c.l.b16 %v722
        %v884 = vunpack.c.l.b16 %v723
        %v885 = vunpack.c.l.b16 %v724
        %v886 = vunpack.c.l.b16 %v725
        %v887 = vunpack.c.l.b16 %v726
        %v888 = vunpack.c.l.b16 %v727
        %v889 = vunpack.c.l.b16 %v728
        %v890 = vunpack.c.l.b16 %v729
        %v891 = vpack.c.b16 %v876, %v875
        %v892 = vpack.c.b16 %v878, %v877
        %v893 = vpack.c.b16 %v880, %v879
        %v894 = vpack.c.b16 %v882, %v881
        %v895 = vpack.c.b16 %v884, %v883
        %v896 = vpack.c.b16 %v886, %v885
        %v897 = vpack.c.b16 %v888, %v887
        %v898 = vpack.c.b16 %v890, %v889
        %907 = vmatprep.subr.bf16.mxu0 0
        %908 = vmatpush1.bf16.msra.mxu0 %v891
        %909 = vmatprep.subr.bf16.mxu0 0
        %910 = vmatpush1.bf16.msra.mxu0 %v892
        %911 = vmatprep.subr.bf16.mxu0 0
        %912 = vmatpush1.bf16.msra.mxu0 %v893
        %913 = vmatprep.subr.bf16.mxu0 0
        %914 = vmatpush1.bf16.msra.mxu0 %v894
        %915 = vmatprep.subr.bf16.mxu0 0
        %916 = vmatpush1.bf16.msra.mxu0 %v895
        %917 = vmatprep.subr.bf16.mxu0 0
        %918 = vmatpush1.bf16.msra.mxu0 %v896
        %919 = vmatprep.subr.bf16.mxu0 0
        %920 = vmatpush1.bf16.msra.mxu0 %v897
        %921 = vmatprep.subr.bf16.mxu0 0
        %922 = vmatpush1.bf16.msra.mxu0 %v898
        %923 = vmatprep.subr.bf16.mxu0 0
        %924 = vmatpush1.bf16.msra.mxu0 0
        %925 = vmatprep.subr.bf16.mxu0 0
        %926 = vmatpush1.bf16.msra.mxu0 0
        %927 = vmatprep.subr.bf16.mxu0 0
        %928 = vmatpush1.bf16.msra.mxu0 0
        %929 = vmatprep.subr.bf16.mxu0 0
        %930 = vmatpush1.bf16.msra.mxu0 0
        %931 = vmatprep.subr.bf16.mxu0 0
        %932 = vmatpush1.bf16.msra.mxu0 0
        %933 = vmatprep.subr.bf16.mxu0 0
        %934 = vmatpush1.bf16.msra.mxu0 0
        %935 = vmatprep.subr.bf16.mxu0 0
        %936 = vmatpush1.bf16.msra.mxu0 0
        %937 = vmatprep.subr.bf16.mxu0 0
        %938 = vmatpush1.bf16.msra.mxu0 0
        %939 = vmatprep.mubr.bf16.mxu0 0
        %940 = vmatmul.mubr.bf16.gmra.mrb[0].mxu0 %v754
        %v941 = vpop.f32.mrb[0].mxu0
        %v942 = vadd.f32 %v852, %v941
        %v943 = vpop.f32.mrb[0].mxu0
        %v944 = vpop.f32.mrb[0].mxu0
        %v945 = vadd.f32 %v855, %v944
        %v946 = vpop.f32.mrb[0].mxu0
        %947 = vdwg.mxu0
        %v948 = vld [vmem:[#allocation3] sm:$0xe]
        %s949 = scalar_lea.vmem [#allocation9], 128
        %v950 = vld [vmem:[%s949] sm:$0xf]
        %v951 = vld [vmem:[%s949 + $0x4] sm:$0xf]
        %v952 = vld [vmem:[%s949 + $0x8] sm:$0xf]
        %v953 = vld [vmem:[%s949 + $0xc] sm:$0xf]
        %v954 = vld [vmem:[%s949 + $0x10] sm:$0xf]
        %v955 = vld [vmem:[%s949 + $0x14] sm:$0xf]
        %v956 = vld [vmem:[%s949 + $0x18] sm:$0xf]
        %v957 = vld [vmem:[%s949 + $0x1c] sm:$0xf]
        %v958 = vld [vmem:[%s949 + $0x20] sm:$0xf]
        %v959 = vld [vmem:[%s949 + $0x24] sm:$0xf]
        %v960 = vld [vmem:[%s949 + $0x28] sm:$0xf]
        %v961 = vld [vmem:[%s949 + $0x2c] sm:$0xf]
        %v962 = vld [vmem:[%s949 + $0x30] sm:$0xf]
        %v963 = vld [vmem:[%s949 + $0x34] sm:$0xf]
        %v964 = vld [vmem:[%s949 + $0x38] sm:$0xf]
        %v965 = vld [vmem:[%s949 + $0x3c] sm:$0xf]
        %v967 = vunpack.c.l.b16 %v948
        %v968 = vpack.c.b16 %v752, %v967
        %v969 = vrot.slane %v968, 1
        %v970 = vrot.slane %v755, 1
        %v971 = vsel %vm583, %v969, %v970
        %v989 = vunpack.c.l.b16 %v950
        %v990 = vunpack.c.l.b16 %v951
        %v991 = vunpack.c.l.b16 %v952
        %v992 = vunpack.c.l.b16 %v953
        %v993 = vunpack.c.l.b16 %v954
        %v994 = vunpack.c.l.b16 %v955
        %v995 = vunpack.c.l.b16 %v956
        %v996 = vunpack.c.l.b16 %v957
        %v997 = vunpack.c.l.b16 %v958
        %v998 = vunpack.c.l.b16 %v959
        %v999 = vunpack.c.l.b16 %v960
        %v1000 = vunpack.c.l.b16 %v961
        %v1001 = vunpack.c.l.b16 %v962
        %v1002 = vunpack.c.l.b16 %v963
        %v1003 = vunpack.c.l.b16 %v964
        %v1004 = vunpack.c.l.b16 %v965
        %v1005 = vpack.c.b16 %v990, %v989
        %v1006 = vpack.c.b16 %v992, %v991
        %v1007 = vpack.c.b16 %v994, %v993
        %v1008 = vpack.c.b16 %v996, %v995
        %v1009 = vpack.c.b16 %v998, %v997
        %v1010 = vpack.c.b16 %v1000, %v999
        %v1011 = vpack.c.b16 %v1002, %v1001
        %v1012 = vpack.c.b16 %v1004, %v1003
        %1021 = vmatprep.subr.bf16.mxu0 0
        %1022 = vmatpush1.bf16.msra.mxu0 %v1005
        %1023 = vmatprep.subr.bf16.mxu0 0
        %1024 = vmatpush1.bf16.msra.mxu0 %v1006
        %1025 = vmatprep.subr.bf16.mxu0 0
        %1026 = vmatpush1.bf16.msra.mxu0 %v1007
        %1027 = vmatprep.subr.bf16.mxu0 0
        %1028 = vmatpush1.bf16.msra.mxu0 %v1008
        %1029 = vmatprep.subr.bf16.mxu0 0
        %1030 = vmatpush1.bf16.msra.mxu0 %v1009
        %1031 = vmatprep.subr.bf16.mxu0 0
        %1032 = vmatpush1.bf16.msra.mxu0 %v1010
        %1033 = vmatprep.subr.bf16.mxu0 0
        %1034 = vmatpush1.bf16.msra.mxu0 %v1011
        %1035 = vmatprep.subr.bf16.mxu0 0
        %1036 = vmatpush1.bf16.msra.mxu0 %v1012
        %1037 = vmatprep.subr.bf16.mxu0 0
        %1038 = vmatpush1.bf16.msra.mxu0 0
        %1039 = vmatprep.subr.bf16.mxu0 0
        %1040 = vmatpush1.bf16.msra.mxu0 0
        %1041 = vmatprep.subr.bf16.mxu0 0
        %1042 = vmatpush1.bf16.msra.mxu0 0
        %1043 = vmatprep.subr.bf16.mxu0 0
        %1044 = vmatpush1.bf16.msra.mxu0 0
        %1045 = vmatprep.subr.bf16.mxu0 0
        %1046 = vmatpush1.bf16.msra.mxu0 0
        %1047 = vmatprep.subr.bf16.mxu0 0
        %1048 = vmatpush1.bf16.msra.mxu0 0
        %1049 = vmatprep.subr.bf16.mxu0 0
        %1050 = vmatpush1.bf16.msra.mxu0 0
        %1051 = vmatprep.subr.bf16.mxu0 0
        %1052 = vmatpush1.bf16.msra.mxu0 0
        %1053 = vmatprep.mubr.bf16.mxu0 0
        %1054 = vmatmul.mubr.bf16.gmra.mrb[0].mxu0 %v971
        %v1055 = vpop.f32.mrb[0].mxu0
        %v1056 = vadd.f32 0.0, %v1055
        %v1057 = vpop.f32.mrb[0].mxu0
        %v1058 = vpop.f32.mrb[0].mxu0
        %v1059 = vadd.f32 0.0, %v1058
        %v1060 = vpop.f32.mrb[0].mxu0
        %1061 = vdwg.mxu0
        %v1062 = vadd.f32 %v942, %v1056
        %v1063 = vadd.f32 %v945, %v1059
        %v1064 = vld [vmem:[%s4] sm:$0x1]
        %v1066 = vlaneseq
        %v1067 = vshrl.u32 %v1066, 7
        %v1068 = vsub.s32 0, %v1067
        %v1069 = vrot.slane %v1064, %v1068
        %v1071 = vadd.f32 %v1062, %v1069
        %v1072 = vadd.f32 %v1063, %v1069
        %v1073 = vld [vmem:[#allocation2] sm:$0xf]
        %v1074 = vld [vmem:[#allocation2 + $0x4] sm:$0xf]
        %v1075 = vld [vmem:[#allocation2 + $0x8] sm:$0x1]
        %v1076 = vld [vmem:[#allocation10] sm:$0xf]
        %v1077 = vld [vmem:[#allocation10 + $0x4] sm:$0xf]
        %v1078 = vld [vmem:[#allocation10 + $0x8] sm:$0xf]
        %v1079 = vld [vmem:[#allocation10 + $0xc] sm:$0xf]
        %v1080 = vld [vmem:[#allocation10 + $0x10] sm:$0xf]
        %v1081 = vld [vmem:[#allocation10 + $0x14] sm:$0xf]
        %v1082 = vld [vmem:[#allocation10 + $0x18] sm:$0xf]
        %v1083 = vld [vmem:[#allocation10 + $0x1c] sm:$0xf]
        %v1084 = vld [vmem:[%s6] sm:$0x1]
        %v1086 = vlaneseq
        %v1087 = vshrl.u32 %v1086, 7
        %v1088 = vsub.s32 0, %v1087
        %v1089 = vrot.slane %v1084, %v1088
        %v1094 = vunpack.c.l.b16 %v1073
        %v1095 = vunpack.c.l.b16 %v1074
        %v1096 = vunpack.c.l.b16 %v1075
        %v1097 = vpack.c.b16 %v1095, %v1094
        %v1098 = vpack.c.b16 %v1096, %v1096
        %v1100 = vshrl.u32 %v1097, 16
        %v1102 = vshll.u32 %v1097, 16
        %v1104 = vrot.slane %v1102, 1
        %v1105 = vor.u32 %v1100, %v1104
        %v1107 = vshll.u32 %v1098, 16
        %v1109 = vrot.slane %v1107, 1
        %v1110 = vsel %vm421, %v1105, %v1109
        %v1119 = vunpack.c.l.b16 %v1076
        %v1120 = vunpack.c.l.b16 %v1077
        %v1121 = vunpack.c.l.b16 %v1078
        %v1122 = vunpack.c.l.b16 %v1079
        %v1123 = vunpack.c.l.b16 %v1080
        %v1124 = vunpack.c.l.b16 %v1081
        %v1125 = vunpack.c.l.b16 %v1082
        %v1126 = vunpack.c.l.b16 %v1083
        %v1127 = vpack.c.b16 %v1120, %v1119
        %v1128 = vpack.c.b16 %v1122, %v1121
        %v1129 = vpack.c.b16 %v1124, %v1123
        %v1130 = vpack.c.b16 %v1126, %v1125
        %v1136 = vsel %vm458, %v1110, 0
        %1138 = vmatprep.subr.bf16.mxu0 0
        %1139 = vmatpush1.bf16.msra.mxu0 %v1127
        %1140 = vmatprep.subr.bf16.mxu0 0
        %1141 = vmatpush1.bf16.msra.mxu0 %v1128
        %1142 = vmatprep.subr.bf16.mxu0 0
        %1143 = vmatpush1.bf16.msra.mxu0 %v1129
        %1144 = vmatprep.subr.bf16.mxu0 0
        %1145 = vmatpush1.bf16.msra.mxu0 %v1130
        %1146 = vmatprep.subr.bf16.mxu0 0
        %1147 = vmatpush1.bf16.msra.mxu0 0
        %1148 = vmatprep.subr.bf16.mxu0 0
        %1149 = vmatpush1.bf16.msra.mxu0 0
        %1150 = vmatprep.subr.bf16.mxu0 0
        %1151 = vmatpush1.bf16.msra.mxu0 0
        %1152 = vmatprep.subr.bf16.mxu0 0
        %1153 = vmatpush1.bf16.msra.mxu0 0
        %1154 = vmatprep.subr.bf16.mxu0 0
        %1155 = vmatpush1.bf16.msra.mxu0 0
        %1156 = vmatprep.subr.bf16.mxu0 0
        %1157 = vmatpush1.bf16.msra.mxu0 0
        %1158 = vmatprep.subr.bf16.mxu0 0
        %1159 = vmatpush1.bf16.msra.mxu0 0
        %1160 = vmatprep.subr.bf16.mxu0 0
        %1161 = vmatpush1.bf16.msra.mxu0 0
        %1162 = vmatprep.subr.bf16.mxu0 0
        %1163 = vmatpush1.bf16.msra.mxu0 0
        %1164 = vmatprep.subr.bf16.mxu0 0
        %1165 = vmatpush1.bf16.msra.mxu0 0
        %1166 = vmatprep.subr.bf16.mxu0 0
        %1167 = vmatpush1.bf16.msra.mxu0 0
        %1168 = vmatprep.subr.bf16.mxu0 0
        %1169 = vmatpush1.bf16.msra.mxu0 0
        %1170 = vmatprep.mubr.bf16.mxu0 0
        %1171 = vmatmul.mubr.bf16.gmra.mrb[0].mxu0 %v1136
        %v1172 = vpop.f32.mrb[0].mxu0
        %v1173 = vadd.f32 %v1089, %v1172
        %v1174 = vpop.f32.mrb[0].mxu0
        %v1175 = vpop.f32.mrb[0].mxu0
        %v1176 = vadd.f32 %v1089, %v1175
        %v1177 = vpop.f32.mrb[0].mxu0
        %1178 = vdwg.mxu0
        %v1179 = vadd.f32 %v1071, %v1173
        %v1180 = vadd.f32 %v1072, %v1176
        %v1181 = vmax.f32 %v1179, 0.0
        %v1182 = vmax.f32 %v1180, 0.0
        %1183 = vst [vmem:[%s340] sm:$0xff] %v1181
        %1184 = vst [vmem:[%s340 + $0x8] sm:$0xff] %v1182
        %s1185 = sand.u32 %s186, 1
        %s1186 = scalar_lea.sflag [#allocation6], %s1185
        %s1187 = sand.u32 %s186, 1
        %s1188 = smul.addr %s1187, 16
        %s1189 = scalar_lea.vmem [#allocation12], %s1188
        // Predicated region
        $region65: #{tpu_custom_call.1} parent=47 // pred_check
          %p1190 = pneg %p196
        $region66: #{tpu_custom_call.1} parent=47 // pred_check_branch
          %1192 = sbr.rel (%p1190) target = $region68
        $region67: #{tpu_custom_call.1} parent=47 // pred_region
          %s1194 = ssub.s32 256, 256
          %1195 = vsyncadd %s1186, %s1194
          %s1196 = smul.addr %s26, 2
          %s1197 = smul.addr %s1196, 128
          %s1198 = scalar_lea.hbm %s7, %s1197
          %s1199 = sshll.u32 %s1189, 4
          %s1200 = int_to_ptr.vmem [resolvable:$true] %s1199
          %1205 = dma.vmem_to_hbm [thread:$0]  %s1200, 256, %s1198, %s1186, 128, 128, 8
        $region68: #{tpu_custom_call.1} parent=47 // pred_fallthru
          _
      $region48: #{tpu_custom_call.1} parent=5 // pred_fallthru
        _
      %p1206 = scmp.le.s32.totalorder 2, %s21
      // Predicated region
      $region69: #{tpu_custom_call.1} parent=5 // pred_check
        %p1207 = pneg %p1206
      $region70: #{tpu_custom_call.1} parent=5 // pred_check_branch
        %1209 = sbr.rel (%p1207) target = $region72
      $region71: #{tpu_custom_call.1} parent=5 // pred_region
        %s1210 = ssub.s32 %s21, 2
        // Predicated region
        $region73: #{tpu_custom_call.1} parent=71 // pred_check
          %p1211 = pneg %p202
        $region74: #{tpu_custom_call.1} parent=71 // pred_check_branch
          %1213 = sbr.rel (%p1211) target = $region76
        $region75: #{tpu_custom_call.1} parent=71 // pred_region
          %s1214 = sand.u32 %s187, 1
          %s1215 = scalar_lea.sflag [#allocation6], %s1214
          %s1216 = sand.u32 %s187, 1
          %s1217 = smul.addr %s1216, 16
          %s1218 = scalar_lea.vmem [#allocation12], %s1217
          %1219 = dma.done %s1215, 256
        $region76: #{tpu_custom_call.1} parent=71 // pred_fallthru
          _
      $region72: #{tpu_custom_call.1} parent=5 // pred_fallthru
        _
    $region6: #{tpu_custom_call.1} parent=1 // loop_footer
      %s25 = sadd.s32 1, %s21
    $region7: #{tpu_custom_call.1} parent=1 // loop_footer_branch
      %20 = sbr.rel target = $region3
    $region8: #{tpu_custom_call.1} parent=1 // loop_exit
      _
    %1220 = vsyncpa [#allocation5], 1
    %s1221 = scalar_lea.sflag [#allocation5], 1
    %1222 = vsyncpa %s1221, 1
    %1223 = vsyncpa [#allocation8], 1
    %1224 = vsyncpa [#allocation11], 1
    %1225 = vsyncpa [#allocation6], 1
    %s1226 = scalar_lea.sflag [#allocation6], 1
    %1227 = vsyncpa %s1226, 1

</llo_original>
